<compile_context>
chip_gen: v6e
topology: v6e:2x2x1
jax: 0.10.0
libtpu: 0.0.40
codegen_flags: <defaults>
</compile_context>

<pallas_src>
import math
from functools import partial

import jax
import jax.numpy as jnp
from jax.experimental import pallas as pl
from jax.experimental.pallas import tpu as pltpu


_LANE = 128
_BATCH_TILE_MAX = 128


def _round_up(x, m):
    return ((x + m - 1) // m) * m


# ----------------------------------------------------------------------------
# Pallas kernels
# ----------------------------------------------------------------------------
def _classifier_kernel(x_ref, w1_ref, w2_ref, w3_ref, bias_ref, out_ref, *,
                       h, h2, out_pad, o2, o3):
    """`t is None` branch.  x cast in-kernel; packed-bias slices are static
    and start at 128-aligned lane offsets."""
    wdt = w1_ref.dtype
    x = x_ref[...].astype(wdt)                                  # (tb, D)
    b1 = bias_ref[:, 0:h]                                       # (1, h)   f32
    b2 = bias_ref[:, o2:o2 + h2]                                # (1, h2)  f32
    b3 = bias_ref[:, o3:o3 + out_pad]                           # (1, out) f32

    a1 = jnp.dot(x, w1_ref[...], preferred_element_type=jnp.float32) + b1
    a1 = jnp.maximum(a1, 0.0).astype(wdt)
    a2 = jnp.dot(a1, w2_ref[...], preferred_element_type=jnp.float32) + b2
    a2 = jnp.maximum(a2, 0.0).astype(wdt)
    out_ref[...] = (jnp.dot(a2, w3_ref[...], preferred_element_type=jnp.float32)
                    + b3)                                       # (tb, out_pad)


def _fusion_kernel(x_ref, t_ref, t2w_ref, f1x_ref, f1t_ref, f2w_ref, bias_ref,
                   out_ref, *, tdim, h, out_pad, ot1b, ot2b, of1b, of2b):
    """Time-conditioned branch.

      t_norm  = t * (1/1000)
      t_embed = ReLU(ReLU(t_norm @ TW1 + tb1) @ TW2 + tb2)
      logits  = ReLU(concat([x, t_embed]) @ FW1 + fb1) @ FW2 + fb2
    where concat([x, t_embed]) @ FW1 == x @ FW1x + t_embed @ FW1t (FW1 is
    pre-split once at parameter construction).  t1_w/t1_b/t2_b/f1_b/f2_b all
    arrive in one packed f32 array (single DMA).
    """
    wdt = f1x_ref.dtype
    x = x_ref[...].astype(wdt)                                  # (tb, D)
    t_norm = t_ref[...] * (1.0 / 1000.0)                        # (tb, 1) f32

    tw1 = bias_ref[:, 0:tdim]                                   # (1, 64) f32
    tb1 = bias_ref[:, ot1b:ot1b + tdim]
    # Linear(1, 64): contraction dim == 1 -> VPU broadcast multiply, f32
    # (no bf16 VPU on v5e).
    e1 = jnp.maximum(t_norm * tw1 + tb1, 0.0)                   # (tb, 64) f32
    t_emb = (jnp.dot(e1.astype(wdt), t2w_ref[...],
                     preferred_element_type=jnp.float32)
             + bias_ref[:, ot2b:ot2b + h])
    t_emb = jnp.maximum(t_emb, 0.0).astype(wdt)                 # (tb, h)

    hid = (jnp.dot(x, f1x_ref[...], preferred_element_type=jnp.float32)
           + jnp.dot(t_emb, f1t_ref[...], preferred_element_type=jnp.float32)
           + bias_ref[:, of1b:of1b + h])                        # (tb, h) f32
    hid = jnp.maximum(hid, 0.0).astype(wdt)
    out_ref[...] = (jnp.dot(hid, f2w_ref[...], preferred_element_type=jnp.float32)
                    + bias_ref[:, of2b:of2b + out_pad])         # (tb, out_pad)


# ----------------------------------------------------------------------------
# Parameter construction (deterministic, mimics nn.Linear default init)
# ----------------------------------------------------------------------------
def _init_linear(key, fan_in, fan_out):
    k = 1.0 / math.sqrt(fan_in)
    kw, kb = jax.random.split(key)
    w = jax.random.uniform(kw, (fan_in, fan_out), jnp.float32, -k, k)
    b = jax.random.uniform(kb, (1, fan_out), jnp.float32, -k, k)
    return w, b


def _pad_cols(a, n):
    return jnp.pad(a, ((0, 0), (0, n - a.shape[1])))


def _lane_slot(a):
    """Zero-pad a (1, w) row vector to a 128-lane-multiple slot."""
    return _pad_cols(a, _round_up(a.shape[1], _LANE))


def make_latent_classifier_params(key, latent_channels=2, latent_size=8,
                                  num_classes=10, hidden_dim=256,
                                  weight_dtype=jnp.bfloat16):
    """MXU/lane friendly parameters.

    - Logit weights/biases zero-padded to a 128-lane multiple (dense final vst).
    - fusion W1 pre-split once into x-rows / t_embed-rows.
    - All small f32 vectors packed per-branch into ONE array with 128-aligned
      slot offsets (one DMA instead of many).
    - Large weights stored in `weight_dtype` (bf16 default, f32 for parity).
    """
    input_dim = latent_channels * latent_size * latent_size
    out_pad = _round_up(num_classes, _LANE)

    keys = jax.random.split(key, 7)
    c1_w, c1_b = _init_linear(keys[0], input_dim, hidden_dim)
    c2_w, c2_b = _init_linear(keys[1], hidden_dim, hidden_dim // 2)
    c3_w, c3_b = _init_linear(keys[2], hidden_dim // 2, num_classes)
    t1_w, t1_b = _init_linear(keys[3], 1, 64)
    t2_w, t2_b = _init_linear(keys[4], 64, hidden_dim)
    f1_w, f1_b = _init_linear(keys[5], hidden_dim + input_dim, hidden_dim)
    f2_w, f2_b = _init_linear(keys[6], hidden_dim, num_classes)

    wdt = weight_dtype
    cls_bias = jnp.concatenate(
        [_lane_slot(c1_b), _lane_slot(c2_b), _lane_slot(_pad_cols(c3_b, out_pad))],
        axis=1)
    fus_bias = jnp.concatenate(
        [_lane_slot(t1_w), _lane_slot(t1_b), _lane_slot(t2_b), _lane_slot(f1_b),
         _lane_slot(_pad_cols(f2_b, out_pad))], axis=1)

    return {
        # classifier branch
        "c1_w": c1_w.astype(wdt),
        "c2_w": c2_w.astype(wdt),
        "c3_w": _pad_cols(c3_w, out_pad).astype(wdt),
        "cls_bias": cls_bias,                       # f32 [c1_b | c2_b | c3_b]
        # time-embed + fusion branch
        "t2_w": t2_w.astype(wdt),                   # (64, hidden): natural shape
        "f1x_w": f1_w[:input_dim, :].astype(wdt),
        "f1t_w": f1_w[input_dim:, :].astype(wdt),
        "f2_w": _pad_cols(f2_w, out_pad).astype(wdt),
        "fus_bias": fus_bias,                       # f32 [t1_w|t1_b|t2_b|f1_b|f2_b]
    }


# ----------------------------------------------------------------------------
# Packed-bias layouts (static, derived from param shapes)
# ----------------------------------------------------------------------------
def _cls_layout(params):
    h = params["c1_w"].shape[1]
    h2 = params["c2_w"].shape[1]
    out_pad = params["c3_w"].shape[1]
    o2 = _round_up(h, _LANE)
    o3 = o2 + _round_up(h2, _LANE)
    return h, h2, out_pad, o2, o3


def _fus_layout(params):
    tdim = params["t2_w"].shape[0]                  # 64
    h = params["t2_w"].shape[1]
    out_pad = params["f2_w"].shape[1]
    slot = _round_up(tdim, _LANE)
    ot1b = slot
    ot2b = 2 * slot
    of1b = ot2b + _round_up(h, _LANE)
    of2b = of1b + _round_up(h, _LANE)
    return tdim, h, out_pad, ot1b, ot2b, of1b, of2b


# ----------------------------------------------------------------------------
# Forward wrappers
# ----------------------------------------------------------------------------
_COMPILER_PARAMS = pltpu.CompilerParams(
    dimension_semantics=("parallel",),              # batch axis -> 2 TCs on v7x
    vmem_limit_bytes=32 * 1024 * 1024)


def _nbytes(*arrays):
    return int(sum(a.size * a.dtype.itemsize for a in arrays))


def _batch_tiling(b):
    # Full bf16 sublane packing (16 rows) and <=128 rows per MXU pass.
    tb = min(_round_up(max(b, 16), 16), _BATCH_TILE_MAX)
    b_pad = _round_up(b, tb)
    return b_pad, tb


def _const_spec(arr):
    # Weight stays resident in VMEM across grid steps (constant block index).
    return pl.BlockSpec(arr.shape, lambda i: (0,) * arr.ndim)


@partial(jax.jit, static_argnames=("num_classes",))
def _forward_plain(params, x, *, num_classes):
    b = x.shape[0]
    d, h = params["c1_w"].shape
    _, h2, out_pad, o2, o3 = _cls_layout(params)

    b_pad, tb = _batch_tiling(b)
    x_flat = x.reshape(b, -1)                        # f32; bf16 cast in-kernel
    if b_pad != b:
        x_flat = jnp.pad(x_flat, ((0, b_pad - b), (0, 0)))

    args = (x_flat, params["c1_w"], params["c2_w"], params["c3_w"],
            params["cls_bias"])
    kernel = partial(_classifier_kernel, h=h, h2=h2, out_pad=out_pad, o2=o2, o3=o3)
    flops = 2 * b_pad * (d * h + h * h2 + h2 * out_pad)

    out = pl.pallas_call(
        kernel,
        out_shape=jax.ShapeDtypeStruct((b_pad, out_pad), jnp.float32),
        grid=(b_pad // tb,),
        in_specs=[
            pl.BlockSpec((tb, d), lambda i: (i, 0)),
            _const_spec(params["c1_w"]),
            _const_spec(params["c2_w"]),
            _const_spec(params["c3_w"]),
            _const_spec(params["cls_bias"]),
        ],
        out_specs=pl.BlockSpec((tb, out_pad), lambda i: (i, 0)),
        cost_estimate=pl.CostEstimate(
            flops=flops, transcendentals=0,
            bytes_accessed=_nbytes(*args) + b_pad * out_pad * 4),
        compiler_params=_COMPILER_PARAMS,
    )(*args)
    return out[:b, :num_classes]


@partial(jax.jit, static_argnames=("num_classes",))
def _forward_fused(params, x, t, *, num_classes):
    b = x.shape[0]
    d, h = params["f1x_w"].shape
    tdim, _, out_pad, ot1b, ot2b, of1b, of2b = _fus_layout(params)

    b_pad, tb = _batch_tiling(b)
    x_flat = x.reshape(b, -1)                        # f32; bf16 cast in-kernel
    t_col = t.astype(jnp.float32).reshape(b, 1)
    if b_pad != b:
        x_flat = jnp.pad(x_flat, ((0, b_pad - b), (0, 0)))
        t_col = jnp.pad(t_col, ((0, b_pad - b), (0, 0)))

    args = (x_flat, t_col, params["t2_w"], params["f1x_w"], params["f1t_w"],
            params["f2_w"], params["fus_bias"])
    kernel = partial(_fusion_kernel, tdim=tdim, h=h, out_pad=out_pad,
                     ot1b=ot1b, ot2b=ot2b, of1b=of1b, of2b=of2b)
    flops = 2 * b_pad * (tdim + tdim * h + d * h + h * h + h * out_pad)

    out = pl.pallas_call(
        kernel,
        out_shape=jax.ShapeDtypeStruct((b_pad, out_pad), jnp.float32),
        grid=(b_pad // tb,),
        in_specs=[
            pl.BlockSpec((tb, d), lambda i: (i, 0)),
            pl.BlockSpec((tb, 1), lambda i: (i, 0)),
            _const_spec(params["t2_w"]),
            _const_spec(params["f1x_w"]),
            _const_spec(params["f1t_w"]),
            _const_spec(params["f2_w"]),
            _const_spec(params["fus_bias"]),
        ],
        out_specs=pl.BlockSpec((tb, out_pad), lambda i: (i, 0)),
        cost_estimate=pl.CostEstimate(
            flops=flops, transcendentals=0,
            bytes_accessed=_nbytes(*args) + b_pad * out_pad * 4),
        compiler_params=_COMPILER_PARAMS,
    )(*args)
    return out[:b, :num_classes]


def latent_classifier_forward(params, x, t=None, *, num_classes=10):
    """x: (B, C, H, W) float32 latent (NCHW), t: optional (B,) int/float."""
    if t is None:
        return _forward_plain(params, x, num_classes=num_classes)
    return _forward_fused(params, x, t, num_classes=num_classes)


# ----------------------------------------------------------------------------
# Pure-JAX reference (same quantization points, f32 accumulation)
# ----------------------------------------------------------------------------
def _reference(params, x, t, num_classes):
    f32 = jnp.float32
    wdt = params["c1_w"].dtype
    b = x.shape[0]
    xf = x.reshape(b, -1).astype(wdt).astype(f32)
    if t is None:
        h, h2, out_pad, o2, o3 = _cls_layout(params)
        pb = params["cls_bias"]
        a1 = jnp.maximum(xf @ params["c1_w"].astype(f32) + pb[:, 0:h], 0.0)
        a2 = jnp.maximum(a1.astype(wdt).astype(f32)
                         @ params["c2_w"].astype(f32) + pb[:, o2:o2 + h2], 0.0)
        out = (a2.astype(wdt).astype(f32) @ params["c3_w"].astype(f32)
               + pb[:, o3:o3 + out_pad])
        return out[:, :num_classes]
    tdim, h, out_pad, ot1b, ot2b, of1b, of2b = _fus_layout(params)
    pb = params["fus_bias"]
    tn = t.astype(f32).reshape(b, 1) / 1000.0
    e1 = jnp.maximum(tn * pb[:, 0:tdim] + pb[:, ot1b:ot1b + tdim], 0.0)
    te = jnp.maximum(e1.astype(wdt).astype(f32) @ params["t2_w"].astype(f32)
                     + pb[:, ot2b:ot2b + h], 0.0)
    hid = jnp.maximum(xf @ params["f1x_w"].astype(f32)
                      + te.astype(wdt).astype(f32) @ params["f1t_w"].astype(f32)
                      + pb[:, of1b:of1b + h], 0.0)
    out = (hid.astype(wdt).astype(f32) @ params["f2_w"].astype(f32)
           + pb[:, of2b:of2b + out_pad])
    return out[:, :num_classes]


# ----------------------------------------------------------------------------
# main
# ----------------------------------------------------------------------------
if __name__ == "__main__":
    batch = 2
    latent_channels = 4
    latent_size = 8          # input_dim = 4*8*8 = 256
    num_classes = 10
    hidden_dim = 256

    key = jax.random.PRNGKey(0)
    k_params, k_x, k_t = jax.random.split(key, 3)

    params = make_latent_classifier_params(
        k_params, latent_channels, latent_size, num_classes, hidden_dim)

    x = jax.random.normal(
        k_x, (batch, latent_channels, latent_size, latent_size), jnp.float32)
    t = jax.random.randint(k_t, (batch,), 0, 1000)

    # Branch 1: no timestep -> plain classifier MLP (Dropout = identity / eval).
    logits_plain = latent_classifier_forward(params, x, num_classes=num_classes)
    # Branch 2: timestep conditioning -> time-embed + fusion MLP.
    logits_fused = latent_classifier_forward(params, x, t=t,
                                             num_classes=num_classes)
    jax.block_until_ready((logits_plain, logits_fused))

    assert logits_plain.shape == (batch, num_classes)
    assert logits_fused.shape == (batch, num_classes)

    ref_plain = _reference(params, x, None, num_classes)
    ref_fused = _reference(params, x, t, num_classes)
    assert jnp.allclose(logits_plain, ref_plain, atol=2e-2, rtol=2e-2)
    assert jnp.allclose(logits_fused, ref_fused, atol=2e-2, rtol=2e-2)

    print("KERNEL_OK")
</pallas_src>

<mosaic_0001>
module attributes {stable_mosaic.version = 11 : i64} {
  func.func @_classifier_kernel(%arg0: i32, %arg1: memref<16x256xf32, #tpu.memory_space<vmem>>, %arg2: memref<256x256xbf16, #tpu.memory_space<vmem>>, %arg3: memref<256x128xbf16, #tpu.memory_space<vmem>>, %arg4: memref<128x128xbf16, #tpu.memory_space<vmem>>, %arg5: memref<1x512xf32, #tpu.memory_space<vmem>>, %arg6: memref<16x128xf32, #tpu.memory_space<vmem>>) attributes {dimension_semantics = [#tpu.dimension_semantics<parallel>], iteration_bounds = array<i64: 1>, scalar_prefetch = 0 : i64, scratch_operands = 0 : i64, tpu.core_type = #tpu.core_type<tc>, window_params = [{transform_indices = @transform_0, window_bounds = array<i64: 16, 256>}, {pipeline_mode = #tpu.pipeline_mode<synchronous>, transform_indices = @transform_1, window_bounds = array<i64: 256, 256>}, {pipeline_mode = #tpu.pipeline_mode<synchronous>, transform_indices = @transform_2, window_bounds = array<i64: 256, 128>}, {pipeline_mode = #tpu.pipeline_mode<synchronous>, transform_indices = @transform_3, window_bounds = array<i64: 128, 128>}, {pipeline_mode = #tpu.pipeline_mode<synchronous>, transform_indices = @transform_4, window_bounds = array<i64: 1, 512>}, {transform_indices = @transform_5, window_bounds = array<i64: 16, 128>}]} {
    %c0 = arith.constant 0 : index
    %c0_0 = arith.constant 0 : index
    %0 = vector.load %arg1[%c0, %c0_0] : memref<16x256xf32, #tpu.memory_space<vmem>>, vector<16x256xf32>
    %1 = arith.truncf %0 : vector<16x256xf32> to vector<16x256xbf16>
    %c0_1 = arith.constant 0 : index
    %c0_2 = arith.constant 0 : index
    %2 = vector.load %arg5[%c0_1, %c0_2] : memref<1x512xf32, #tpu.memory_space<vmem>>, vector<1x256xf32>
    %c0_3 = arith.constant 0 : index
    %c256 = arith.constant 256 : index
    %3 = vector.load %arg5[%c0_3, %c256] : memref<1x512xf32, #tpu.memory_space<vmem>>, vector<1x128xf32>
    %c0_4 = arith.constant 0 : index
    %c384 = arith.constant 384 : index
    %4 = vector.load %arg5[%c0_4, %c384] : memref<1x512xf32, #tpu.memory_space<vmem>>, vector<1x128xf32>
    %c0_5 = arith.constant 0 : index
    %c0_6 = arith.constant 0 : index
    %5 = vector.load %arg2[%c0_5, %c0_6] : memref<256x256xbf16, #tpu.memory_space<vmem>>, vector<256x256xbf16>
    %cst = arith.constant dense<0.000000e+00> : vector<16x256xf32>
    %6 = tpu.matmul %1, %5, %cst {dimension_numbers = #tpu.dot_dimension_numbers<[1], [0], [0], [1], [0, 0, 1, 1], [], []>} : vector<16x256xbf16>, vector<256x256xbf16>, vector<16x256xf32> -> vector<16x256xf32>
    %7 = vector.broadcast %2 : vector<1x256xf32> to vector<16x256xf32>
    %8 = arith.addf %6, %7 : vector<16x256xf32>
    %cst_7 = arith.constant 0.000000e+00 : f32
    %9 = vector.broadcast %cst_7 : f32 to vector<16x256xf32>
    %10 = arith.maximumf %8, %9 : vector<16x256xf32>
    %11 = arith.truncf %10 : vector<16x256xf32> to vector<16x256xbf16>
    %c0_8 = arith.constant 0 : index
    %c0_9 = arith.constant 0 : index
    %12 = vector.load %arg3[%c0_8, %c0_9] : memref<256x128xbf16, #tpu.memory_space<vmem>>, vector<256x128xbf16>
    %cst_10 = arith.constant dense<0.000000e+00> : vector<16x128xf32>
    %13 = tpu.matmul %11, %12, %cst_10 {dimension_numbers = #tpu.dot_dimension_numbers<[1], [0], [0], [1], [0, 0, 1, 1], [], []>} : vector<16x256xbf16>, vector<256x128xbf16>, vector<16x128xf32> -> vector<16x128xf32>
    %14 = vector.broadcast %3 : vector<1x128xf32> to vector<16x128xf32>
    %15 = arith.addf %13, %14 : vector<16x128xf32>
    %cst_11 = arith.constant 0.000000e+00 : f32
    %16 = vector.broadcast %cst_11 : f32 to vector<16x128xf32>
    %17 = arith.maximumf %15, %16 : vector<16x128xf32>
    %18 = arith.truncf %17 : vector<16x128xf32> to vector<16x128xbf16>
    %c0_12 = arith.constant 0 : index
    %c0_13 = arith.constant 0 : index
    %19 = vector.load %arg4[%c0_12, %c0_13] : memref<128x128xbf16, #tpu.memory_space<vmem>>, vector<128x128xbf16>
    %cst_14 = arith.constant dense<0.000000e+00> : vector<16x128xf32>
    %20 = tpu.matmul %18, %19, %cst_14 {dimension_numbers = #tpu.dot_dimension_numbers<[1], [0], [0], [1], [0, 0, 1, 1], [], []>} : vector<16x128xbf16>, vector<128x128xbf16>, vector<16x128xf32> -> vector<16x128xf32>
    %21 = vector.broadcast %4 : vector<1x128xf32> to vector<16x128xf32>
    %22 = arith.addf %20, %21 : vector<16x128xf32>
    %c0_15 = arith.constant 0 : index
    %c0_16 = arith.constant 0 : index
    %23 = vector.load %arg6[%c0_15, %c0_16] : memref<16x128xf32, #tpu.memory_space<vmem>>, vector<16x128xf32>
    tpu.vector_store %arg6[%c0_15, %c0_16], %22 {strides = array<i32>} : memref<16x128xf32, #tpu.memory_space<vmem>>, vector<16x128xf32>,
    return
  }
  func.func @transform_0(%arg0: i32) -> (i32, i32) {
    %c0_i32 = arith.constant 0 : i32
    %c0_i32_0 = arith.constant 0 : i32
    return %arg0, %c0_i32 : i32, i32
  }
  func.func @transform_1(%arg0: i32) -> (i32, i32) {
    %c0_i32 = arith.constant 0 : i32
    %c0_i32_0 = arith.constant 0 : i32
    %c0_i32_1 = arith.constant 0 : i32
    return %c0_i32, %c0_i32_0 : i32, i32
  }
  func.func @transform_2(%arg0: i32) -> (i32, i32) {
    %c0_i32 = arith.constant 0 : i32
    %c0_i32_0 = arith.constant 0 : i32
    %c0_i32_1 = arith.constant 0 : i32
    return %c0_i32, %c0_i32_0 : i32, i32
  }
  func.func @transform_3(%arg0: i32) -> (i32, i32) {
    %c0_i32 = arith.constant 0 : i32
    %c0_i32_0 = arith.constant 0 : i32
    %c0_i32_1 = arith.constant 0 : i32
    return %c0_i32, %c0_i32_0 : i32, i32
  }
  func.func @transform_4(%arg0: i32) -> (i32, i32) {
    %c0_i32 = arith.constant 0 : i32
    %c0_i32_0 = arith.constant 0 : i32
    %c0_i32_1 = arith.constant 0 : i32
    return %c0_i32, %c0_i32_0 : i32, i32
  }
  func.func @transform_5(%arg0: i32) -> (i32, i32) {
    %c0_i32 = arith.constant 0 : i32
    %c0_i32_0 = arith.constant 0 : i32
    return %arg0, %c0_i32 : i32, i32
  }
}

</mosaic_0001>

<llo_original>
// kernel: _forward_plain.1
$region0: #{_forward_plain.1}
  #allocation0 [shape = 'u32[]', space=smem, size = 0x4, offset = 0x4, fixed_abs, tag = 'smem constant byte address 0x4 - core index']
  #allocation1 [shape = 'u32[144,128]{1,0:T(1,128)}', space=vmem, size = 0x12000, scoped, tag = 'internal scratch']
  %s0 = inlined_call_operand.vmem [shape: f32[16,256], index: 0, kind: input, shape index: {}]
  %s1 = inlined_call_operand.hbm [shape: bf16[256,256], index: 1, kind: input, shape index: {}]
  %s2 = inlined_call_operand.hbm [shape: bf16[256,128], index: 2, kind: input, shape index: {}]
  %s3 = inlined_call_operand.vmem [shape: bf16[128,128], index: 3, kind: input, shape index: {}]
  %s4 = inlined_call_operand.vmem [shape: f32[1,512], index: 4, kind: input, shape index: {}]
  %s5 = inlined_call_operand.vmem [shape: f32[16,128], index: 5, kind: output, shape index: {}]
  %s6 = sld [smem:[#allocation0]]
  $region38: #{_forward_plain.1} parent=0
    _
  %s8 = ssub.s32 1, %s6
  %s9 = scalar_select 0, %s8, %s6
  $region1: #{_forward_plain.1} parent=0
    #allocation2 [shape = 'u8[131072]{0}', space=vmem, size = 0x20000, scoped, tag = 'input window, operand 1, single buffered']
    #allocation3 [shape = 's32[1]{0}', space=sflag, size = 0x4, scoped, tag = 'scoped memory for _forward_plain.1']
    #allocation4 [shape = 'u8[65536]{0}', space=vmem, size = 0x10000, scoped, tag = 'input window, operand 2, single buffered']
    #allocation5 [shape = 's32[1]{0}', space=sflag, size = 0x4, scoped, tag = 'scoped memory for _forward_plain.1']
    %10 = vsyncpa [#allocation3], 0
    %11 = vsyncpa [#allocation5], 0
    // Predicated region
    $region2: #{_forward_plain.1} parent=1 // pred_check
      _
    $region3: #{_forward_plain.1} parent=1 // pred_check_branch
      %13 = sbr.rel (0) target = $region5
    $region4: #{_forward_plain.1} parent=1 // pred_region
      _
    $region5: #{_forward_plain.1} parent=1 // pred_fallthru
      _
    // Predicated region
    $region6: #{_forward_plain.1} parent=1 // pred_check
      _
    $region7: #{_forward_plain.1} parent=1 // pred_check_branch
      %15 = sbr.rel (0) target = $region9
    $region8: #{_forward_plain.1} parent=1 // pred_region
      %s17 = ssub.s32 4096, 4096
      %18 = vsyncadd [#allocation3], %s17
      %s19 = sshll.u32 [#allocation2], 4
      %s20 = int_to_ptr.vmem [resolvable:$true] %s19
      %25 = dma.hbm_to_vmem [thread:$0]  %s1, 4096, %s20, [#allocation3], 128, 128, 8
    $region9: #{_forward_plain.1} parent=1 // pred_fallthru
      _
    // Predicated region
    $region10: #{_forward_plain.1} parent=1 // pred_check
      _
    $region11: #{_forward_plain.1} parent=1 // pred_check_branch
      %27 = sbr.rel (0) target = $region13
    $region12: #{_forward_plain.1} parent=1 // pred_region
      %s29 = ssub.s32 2048, 2048
      %30 = vsyncadd [#allocation5], %s29
      %s31 = sshll.u32 [#allocation4], 4
      %s32 = int_to_ptr.vmem [resolvable:$true] %s31
      %37 = dma.hbm_to_vmem [thread:$0]  %s2, 2048, %s32, [#allocation5], 64, 64, 4
    $region13: #{_forward_plain.1} parent=1 // pred_fallthru
      _
    // Predicated region
    $region14: #{_forward_plain.1} parent=1 // pred_check
      _
    $region15: #{_forward_plain.1} parent=1 // pred_check_branch
      %39 = sbr.rel (0) target = $region17
    $region16: #{_forward_plain.1} parent=1 // pred_region
      _
    $region17: #{_forward_plain.1} parent=1 // pred_fallthru
      _
    // Predicated region
    $region18: #{_forward_plain.1} parent=1 // pred_check
      _
    $region19: #{_forward_plain.1} parent=1 // pred_check_branch
      %41 = sbr.rel (0) target = $region21
    $region20: #{_forward_plain.1} parent=1 // pred_region
      _
    $region21: #{_forward_plain.1} parent=1 // pred_fallthru
      _
    // Predicated region
    $region22: #{_forward_plain.1} parent=1 // pred_check
      _
    $region23: #{_forward_plain.1} parent=1 // pred_check_branch
      %43 = sbr.rel (0) target = $region25
    $region24: #{_forward_plain.1} parent=1 // pred_region
      %44 = dma.done [#allocation3], 4096
    $region25: #{_forward_plain.1} parent=1 // pred_fallthru
      _
    // Predicated region
    $region26: #{_forward_plain.1} parent=1 // pred_check
      _
    $region27: #{_forward_plain.1} parent=1 // pred_check_branch
      %46 = sbr.rel (0) target = $region29
    $region28: #{_forward_plain.1} parent=1 // pred_region
      %47 = dma.done [#allocation5], 2048
    $region29: #{_forward_plain.1} parent=1 // pred_fallthru
      _
    %v49 = vld [vmem:[%s0] sm:$0xff]
    %v50 = vld [vmem:[%s0 + $0x8] sm:$0xff]
    %v51 = vld [vmem:[%s0 + $0x10] sm:$0xff]
    %v52 = vld [vmem:[%s0 + $0x18] sm:$0xff]
    %v53 = vpack.c.bf16 %v51, %v49
    %v54 = vpack.c.bf16 %v52, %v50
    %v55 = vld [vmem:[%s4] sm:$0x3]
    %v56 = vld [vmem:[%s4 + $0x2] sm:$0x1]
    %v57 = vld [vmem:[%s4 + $0x3] sm:$0x1]
    %v58 = vld [vmem:[#allocation2] sm:$0xff]
    %v59 = vld [vmem:[#allocation2 + $0x8] sm:$0xff]
    %v60 = vld [vmem:[#allocation2 + $0x10] sm:$0xff]
    %v61 = vld [vmem:[#allocation2 + $0x18] sm:$0xff]
    %v62 = vld [vmem:[#allocation2 + $0x20] sm:$0xff]
    %v63 = vld [vmem:[#allocation2 + $0x28] sm:$0xff]
    %v64 = vld [vmem:[#allocation2 + $0x30] sm:$0xff]
    %v65 = vld [vmem:[#allocation2 + $0x38] sm:$0xff]
    %v66 = vld [vmem:[#allocation2 + $0x40] sm:$0xff]
    %v67 = vld [vmem:[#allocation2 + $0x48] sm:$0xff]
    %v68 = vld [vmem:[#allocation2 + $0x50] sm:$0xff]
    %v69 = vld [vmem:[#allocation2 + $0x58] sm:$0xff]
    %v70 = vld [vmem:[#allocation2 + $0x60] sm:$0xff]
    %v71 = vld [vmem:[#allocation2 + $0x68] sm:$0xff]
    %v72 = vld [vmem:[#allocation2 + $0x70] sm:$0xff]
    %v73 = vld [vmem:[#allocation2 + $0x78] sm:$0xff]
    %v74 = vld [vmem:[#allocation2 + $0x80] sm:$0xff]
    %v75 = vld [vmem:[#allocation2 + $0x88] sm:$0xff]
    %v76 = vld [vmem:[#allocation2 + $0x90] sm:$0xff]
    %v77 = vld [vmem:[#allocation2 + $0x98] sm:$0xff]
    %v78 = vld [vmem:[#allocation2 + $0xa0] sm:$0xff]
    %v79 = vld [vmem:[#allocation2 + $0xa8] sm:$0xff]
    %v80 = vld [vmem:[#allocation2 + $0xb0] sm:$0xff]
    %v81 = vld [vmem:[#allocation2 + $0xb8] sm:$0xff]
    %v82 = vld [vmem:[#allocation2 + $0xc0] sm:$0xff]
    %v83 = vld [vmem:[#allocation2 + $0xc8] sm:$0xff]
    %v84 = vld [vmem:[#allocation2 + $0xd0] sm:$0xff]
    %v85 = vld [vmem:[#allocation2 + $0xd8] sm:$0xff]
    %v86 = vld [vmem:[#allocation2 + $0xe0] sm:$0xff]
    %v87 = vld [vmem:[#allocation2 + $0xe8] sm:$0xff]
    %v88 = vld [vmem:[#allocation2 + $0xf0] sm:$0xff]
    %v89 = vld [vmem:[#allocation2 + $0xf8] sm:$0xff]
    %v91 = vlaneseq
    %v92 = vshrl.u32 %v91, 7
    %v93 = vsub.s32 0, %v92
    %v94 = vrot.slane %v55, %v93
    %v95 = vlaneseq
    %v96 = vshrl.u32 %v95, 7
    %v97 = vsub.s32 1, %v96
    %v98 = vrot.slane %v55, %v97
    %v133 = vunpack.c.l.b16 %v58
    %v134 = vunpack.c.h.b16 %v58
    %v135 = vunpack.c.l.b16 %v59
    %v136 = vunpack.c.h.b16 %v59
    %v137 = vunpack.c.l.b16 %v60
    %v138 = vunpack.c.h.b16 %v60
    %v139 = vunpack.c.l.b16 %v61
    %v140 = vunpack.c.h.b16 %v61
    %v141 = vunpack.c.l.b16 %v62
    %v142 = vunpack.c.h.b16 %v62
    %v143 = vunpack.c.l.b16 %v63
    %v144 = vunpack.c.h.b16 %v63
    %v145 = vunpack.c.l.b16 %v64
    %v146 = vunpack.c.h.b16 %v64
    %v147 = vunpack.c.l.b16 %v65
    %v148 = vunpack.c.h.b16 %v65
    %v149 = vunpack.c.l.b16 %v66
    %v150 = vunpack.c.h.b16 %v66
    %v151 = vunpack.c.l.b16 %v67
    %v152 = vunpack.c.h.b16 %v67
    %v153 = vunpack.c.l.b16 %v68
    %v154 = vunpack.c.h.b16 %v68
    %v155 = vunpack.c.l.b16 %v69
    %v156 = vunpack.c.h.b16 %v69
    %v157 = vunpack.c.l.b16 %v70
    %v158 = vunpack.c.h.b16 %v70
    %v159 = vunpack.c.l.b16 %v71
    %v160 = vunpack.c.h.b16 %v71
    %v161 = vunpack.c.l.b16 %v72
    %v162 = vunpack.c.h.b16 %v72
    %v163 = vunpack.c.l.b16 %v73
    %v164 = vunpack.c.h.b16 %v73
    %v165 = vunpack.c.l.b16 %v74
    %v166 = vunpack.c.h.b16 %v74
    %v167 = vunpack.c.l.b16 %v75
    %v168 = vunpack.c.h.b16 %v75
    %v169 = vunpack.c.l.b16 %v76
    %v170 = vunpack.c.h.b16 %v76
    %v171 = vunpack.c.l.b16 %v77
    %v172 = vunpack.c.h.b16 %v77
    %v173 = vunpack.c.l.b16 %v78
    %v174 = vunpack.c.h.b16 %v78
    %v175 = vunpack.c.l.b16 %v79
    %v176 = vunpack.c.h.b16 %v79
    %v177 = vunpack.c.l.b16 %v80
    %v178 = vunpack.c.h.b16 %v80
    %v179 = vunpack.c.l.b16 %v81
    %v180 = vunpack.c.h.b16 %v81
    %v181 = vunpack.c.l.b16 %v82
    %v182 = vunpack.c.h.b16 %v82
    %v183 = vunpack.c.l.b16 %v83
    %v184 = vunpack.c.h.b16 %v83
    %v185 = vunpack.c.l.b16 %v84
    %v186 = vunpack.c.h.b16 %v84
    %v187 = vunpack.c.l.b16 %v85
    %v188 = vunpack.c.h.b16 %v85
    %v189 = vunpack.c.l.b16 %v86
    %v190 = vunpack.c.h.b16 %v86
    %v191 = vunpack.c.l.b16 %v87
    %v192 = vunpack.c.h.b16 %v87
    %v193 = vunpack.c.l.b16 %v88
    %v194 = vunpack.c.h.b16 %v88
    %v195 = vunpack.c.l.b16 %v89
    %v196 = vunpack.c.h.b16 %v89
    %v197 = vpack.c.b16 %v135, %v133
    %v198 = vpack.c.b16 %v136, %v134
    %v199 = vpack.c.b16 %v139, %v137
    %v200 = vpack.c.b16 %v140, %v138
    %v201 = vpack.c.b16 %v143, %v141
    %v202 = vpack.c.b16 %v144, %v142
    %v203 = vpack.c.b16 %v147, %v145
    %v204 = vpack.c.b16 %v148, %v146
    %v205 = vpack.c.b16 %v151, %v149
    %v206 = vpack.c.b16 %v152, %v150
    %v207 = vpack.c.b16 %v155, %v153
    %v208 = vpack.c.b16 %v156, %v154
    %v209 = vpack.c.b16 %v159, %v157
    %v210 = vpack.c.b16 %v160, %v158
    %v211 = vpack.c.b16 %v163, %v161
    %v212 = vpack.c.b16 %v164, %v162
    %v213 = vpack.c.b16 %v167, %v165
    %v214 = vpack.c.b16 %v168, %v166
    %v215 = vpack.c.b16 %v171, %v169
    %v216 = vpack.c.b16 %v172, %v170
    %v217 = vpack.c.b16 %v175, %v173
    %v218 = vpack.c.b16 %v176, %v174
    %v219 = vpack.c.b16 %v179, %v177
    %v220 = vpack.c.b16 %v180, %v178
    %v221 = vpack.c.b16 %v183, %v181
    %v222 = vpack.c.b16 %v184, %v182
    %v223 = vpack.c.b16 %v187, %v185
    %v224 = vpack.c.b16 %v188, %v186
    %v225 = vpack.c.b16 %v191, %v189
    %v226 = vpack.c.b16 %v192, %v190
    %v227 = vpack.c.b16 %v195, %v193
    %v228 = vpack.c.b16 %v196, %v194
    %261 = vmatprep.subr.bf16.mxu0 %v212
    %262 = vmatpush1.bf16.msra.mxu0 %v211
    %263 = vmatprep.subr.bf16.mxu0 %v210
    %264 = vmatpush1.bf16.msra.mxu0 %v209
    %265 = vmatprep.subr.bf16.mxu0 %v208
    %266 = vmatpush1.bf16.msra.mxu0 %v207
    %267 = vmatprep.subr.bf16.mxu0 %v206
    %268 = vmatpush1.bf16.msra.mxu0 %v205
    %269 = vmatprep.subr.bf16.mxu0 %v204
    %270 = vmatpush1.bf16.msra.mxu0 %v203
    %271 = vmatprep.subr.bf16.mxu0 %v202
    %272 = vmatpush1.bf16.msra.mxu0 %v201
    %273 = vmatprep.subr.bf16.mxu0 %v200
    %274 = vmatpush1.bf16.msra.mxu0 %v199
    %275 = vmatprep.subr.bf16.mxu0 %v198
    %276 = vmatpush1.bf16.msra.mxu0 %v197
    %277 = vmatprep.subr.bf16.mxu0 %v228
    %278 = vmatpush2.bf16.msra.mxu0 %v227
    %279 = vmatprep.subr.bf16.mxu0 %v226
    %280 = vmatpush2.bf16.msra.mxu0 %v225
    %281 = vmatprep.subr.bf16.mxu0 %v224
    %282 = vmatpush2.bf16.msra.mxu0 %v223
    %283 = vmatprep.subr.bf16.mxu0 %v222
    %284 = vmatpush2.bf16.msra.mxu0 %v221
    %285 = vmatprep.subr.bf16.mxu0 %v220
    %286 = vmatpush2.bf16.msra.mxu0 %v219
    %287 = vmatprep.subr.bf16.mxu0 %v218
    %288 = vmatpush2.bf16.msra.mxu0 %v217
    %289 = vmatprep.subr.bf16.mxu0 %v216
    %290 = vmatpush2.bf16.msra.mxu0 %v215
    %291 = vmatprep.subr.bf16.mxu0 %v214
    %292 = vmatpush2.bf16.msra.mxu0 %v213
    %293 = vmatprep.mubr.bf16.mxu0 %v54
    %294 = vmatmul.mubr.bf16.gmra.mxu0 %v53
    %v295 = vpop.f32.mrf.mxu0
    %v296 = vadd.f32 %v94, %v295
    %v297 = vpop.f32.mrf.mxu0
    %v298 = vadd.f32 %v98, %v297
    %v299 = vpop.f32.mrf.mxu0
    %v300 = vadd.f32 %v94, %v299
    %v301 = vpop.f32.mrf.mxu0
    %v302 = vadd.f32 %v98, %v301
    %303 = vdwg.mxu0
    %v304 = vmax.f32 %v296, 0.0
    %v305 = vmax.f32 %v298, 0.0
    %v306 = vmax.f32 %v300, 0.0
    %v307 = vmax.f32 %v302, 0.0
    %v308 = vpack.c.bf16 %v306, %v304
    %v309 = vpack.c.bf16 %v307, %v305
    %v310 = vld [vmem:[#allocation4] sm:$0xf]
    %v311 = vld [vmem:[#allocation4 + $0x4] sm:$0xf]
    %v312 = vld [vmem:[#allocation4 + $0x8] sm:$0xf]
    %v313 = vld [vmem:[#allocation4 + $0xc] sm:$0xf]
    %v314 = vld [vmem:[#allocation4 + $0x10] sm:$0xf]
    %v315 = vld [vmem:[#allocation4 + $0x14] sm:$0xf]
    %v316 = vld [vmem:[#allocation4 + $0x18] sm:$0xf]
    %v317 = vld [vmem:[#allocation4 + $0x1c] sm:$0xf]
    %v318 = vld [vmem:[#allocation4 + $0x20] sm:$0xf]
    %v319 = vld [vmem:[#allocation4 + $0x24] sm:$0xf]
    %v320 = vld [vmem:[#allocation4 + $0x28] sm:$0xf]
    %v321 = vld [vmem:[#allocation4 + $0x2c] sm:$0xf]
    %v322 = vld [vmem:[#allocation4 + $0x30] sm:$0xf]
    %v323 = vld [vmem:[#allocation4 + $0x34] sm:$0xf]
    %v324 = vld [vmem:[#allocation4 + $0x38] sm:$0xf]
    %v325 = vld [vmem:[#allocation4 + $0x3c] sm:$0xf]
    %v326 = vld [vmem:[#allocation4 + $0x40] sm:$0xf]
    %v327 = vld [vmem:[#allocation4 + $0x44] sm:$0xf]
    %v328 = vld [vmem:[#allocation4 + $0x48] sm:$0xf]
    %v329 = vld [vmem:[#allocation4 + $0x4c] sm:$0xf]
    %v330 = vld [vmem:[#allocation4 + $0x50] sm:$0xf]
    %v331 = vld [vmem:[#allocation4 + $0x54] sm:$0xf]
    %v332 = vld [vmem:[#allocation4 + $0x58] sm:$0xf]
    %v333 = vld [vmem:[#allocation4 + $0x5c] sm:$0xf]
    %v334 = vld [vmem:[#allocation4 + $0x60] sm:$0xf]
    %v335 = vld [vmem:[#allocation4 + $0x64] sm:$0xf]
    %v336 = vld [vmem:[#allocation4 + $0x68] sm:$0xf]
    %v337 = vld [vmem:[#allocation4 + $0x6c] sm:$0xf]
    %v338 = vld [vmem:[#allocation4 + $0x70] sm:$0xf]
    %v339 = vld [vmem:[#allocation4 + $0x74] sm:$0xf]
    %v340 = vld [vmem:[#allocation4 + $0x78] sm:$0xf]
    %v341 = vld [vmem:[#allocation4 + $0x7c] sm:$0xf]
    %v343 = vlaneseq
    %v344 = vshrl.u32 %v343, 7
    %v345 = vsub.s32 0, %v344
    %v346 = vrot.slane %v56, %v345
    %v380 = vunpack.c.l.b16 %v310
    %v381 = vunpack.c.l.b16 %v311
    %v382 = vunpack.c.l.b16 %v312
    %v383 = vunpack.c.l.b16 %v313
    %v384 = vunpack.c.l.b16 %v314
    %v385 = vunpack.c.l.b16 %v315
    %v386 = vunpack.c.l.b16 %v316
    %v387 = vunpack.c.l.b16 %v317
    %v388 = vunpack.c.l.b16 %v318
    %v389 = vunpack.c.l.b16 %v319
    %v390 = vunpack.c.l.b16 %v320
    %v391 = vunpack.c.l.b16 %v321
    %v392 = vunpack.c.l.b16 %v322
    %v393 = vunpack.c.l.b16 %v323
    %v394 = vunpack.c.l.b16 %v324
    %v395 = vunpack.c.l.b16 %v325
    %v396 = vunpack.c.l.b16 %v326
    %v397 = vunpack.c.l.b16 %v327
    %v398 = vunpack.c.l.b16 %v328
    %v399 = vunpack.c.l.b16 %v329
    %v400 = vunpack.c.l.b16 %v330
    %v401 = vunpack.c.l.b16 %v331
    %v402 = vunpack.c.l.b16 %v332
    %v403 = vunpack.c.l.b16 %v333
    %v404 = vunpack.c.l.b16 %v334
    %v405 = vunpack.c.l.b16 %v335
    %v406 = vunpack.c.l.b16 %v336
    %v407 = vunpack.c.l.b16 %v337
    %v408 = vunpack.c.l.b16 %v338
    %v409 = vunpack.c.l.b16 %v339
    %v410 = vunpack.c.l.b16 %v340
    %v411 = vunpack.c.l.b16 %v341
    %v412 = vpack.c.b16 %v381, %v380
    %v413 = vpack.c.b16 %v383, %v382
    %v414 = vpack.c.b16 %v385, %v384
    %v415 = vpack.c.b16 %v387, %v386
    %v416 = vpack.c.b16 %v389, %v388
    %v417 = vpack.c.b16 %v391, %v390
    %v418 = vpack.c.b16 %v393, %v392
    %v419 = vpack.c.b16 %v395, %v394
    %v420 = vpack.c.b16 %v397, %v396
    %v421 = vpack.c.b16 %v399, %v398
    %v422 = vpack.c.b16 %v401, %v400
    %v423 = vpack.c.b16 %v403, %v402
    %v424 = vpack.c.b16 %v405, %v404
    %v425 = vpack.c.b16 %v407, %v406
    %v426 = vpack.c.b16 %v409, %v408
    %v427 = vpack.c.b16 %v411, %v410
    %444 = vmatprep.subr.bf16.mxu0 0
    %445 = vmatpush1.bf16.msra.mxu0 %v419
    %446 = vmatprep.subr.bf16.mxu0 0
    %447 = vmatpush1.bf16.msra.mxu0 %v418
    %448 = vmatprep.subr.bf16.mxu0 0
    %449 = vmatpush1.bf16.msra.mxu0 %v417
    %450 = vmatprep.subr.bf16.mxu0 0
    %451 = vmatpush1.bf16.msra.mxu0 %v416
    %452 = vmatprep.subr.bf16.mxu0 0
    %453 = vmatpush1.bf16.msra.mxu0 %v415
    %454 = vmatprep.subr.bf16.mxu0 0
    %455 = vmatpush1.bf16.msra.mxu0 %v414
    %456 = vmatprep.subr.bf16.mxu0 0
    %457 = vmatpush1.bf16.msra.mxu0 %v413
    %458 = vmatprep.subr.bf16.mxu0 0
    %459 = vmatpush1.bf16.msra.mxu0 %v412
    %460 = vmatprep.subr.bf16.mxu0 0
    %461 = vmatpush2.bf16.msra.mxu0 %v427
    %462 = vmatprep.subr.bf16.mxu0 0
    %463 = vmatpush2.bf16.msra.mxu0 %v426
    %464 = vmatprep.subr.bf16.mxu0 0
    %465 = vmatpush2.bf16.msra.mxu0 %v425
    %466 = vmatprep.subr.bf16.mxu0 0
    %467 = vmatpush2.bf16.msra.mxu0 %v424
    %468 = vmatprep.subr.bf16.mxu0 0
    %469 = vmatpush2.bf16.msra.mxu0 %v423
    %470 = vmatprep.subr.bf16.mxu0 0
    %471 = vmatpush2.bf16.msra.mxu0 %v422
    %472 = vmatprep.subr.bf16.mxu0 0
    %473 = vmatpush2.bf16.msra.mxu0 %v421
    %474 = vmatprep.subr.bf16.mxu0 0
    %475 = vmatpush2.bf16.msra.mxu0 %v420
    %476 = vmatprep.mubr.bf16.mxu0 %v309
    %477 = vmatmul.mubr.bf16.gmra.mxu0 %v308
    %v478 = vpop.f32.mrf.mxu0
    %v479 = vadd.f32 %v346, %v478
    %v480 = vpop.f32.mrf.mxu0
    %v481 = vpop.f32.mrf.mxu0
    %v482 = vadd.f32 %v346, %v481
    %v483 = vpop.f32.mrf.mxu0
    %484 = vdwg.mxu0
    %v485 = vmax.f32 %v479, 0.0
    %v486 = vmax.f32 %v482, 0.0
    %v487 = vpack.c.bf16 %v486, %v485
    %v488 = vld [vmem:[%s3] sm:$0xf]
    %v489 = vld [vmem:[%s3 + $0x4] sm:$0xf]
    %v490 = vld [vmem:[%s3 + $0x8] sm:$0xf]
    %v491 = vld [vmem:[%s3 + $0xc] sm:$0xf]
    %v492 = vld [vmem:[%s3 + $0x10] sm:$0xf]
    %v493 = vld [vmem:[%s3 + $0x14] sm:$0xf]
    %v494 = vld [vmem:[%s3 + $0x18] sm:$0xf]
    %v495 = vld [vmem:[%s3 + $0x1c] sm:$0xf]
    %v496 = vld [vmem:[%s3 + $0x20] sm:$0xf]
    %v497 = vld [vmem:[%s3 + $0x24] sm:$0xf]
    %v498 = vld [vmem:[%s3 + $0x28] sm:$0xf]
    %v499 = vld [vmem:[%s3 + $0x2c] sm:$0xf]
    %v500 = vld [vmem:[%s3 + $0x30] sm:$0xf]
    %v501 = vld [vmem:[%s3 + $0x34] sm:$0xf]
    %v502 = vld [vmem:[%s3 + $0x38] sm:$0xf]
    %v503 = vld [vmem:[%s3 + $0x3c] sm:$0xf]
    %v505 = vlaneseq
    %v506 = vshrl.u32 %v505, 7
    %v507 = vsub.s32 0, %v506
    %v508 = vrot.slane %v57, %v507
    %v526 = vunpack.c.l.b16 %v488
    %v527 = vunpack.c.l.b16 %v489
    %v528 = vunpack.c.l.b16 %v490
    %v529 = vunpack.c.l.b16 %v491
    %v530 = vunpack.c.l.b16 %v492
    %v531 = vunpack.c.l.b16 %v493
    %v532 = vunpack.c.l.b16 %v494
    %v533 = vunpack.c.l.b16 %v495
    %v534 = vunpack.c.l.b16 %v496
    %v535 = vunpack.c.l.b16 %v497
    %v536 = vunpack.c.l.b16 %v498
    %v537 = vunpack.c.l.b16 %v499
    %v538 = vunpack.c.l.b16 %v500
    %v539 = vunpack.c.l.b16 %v501
    %v540 = vunpack.c.l.b16 %v502
    %v541 = vunpack.c.l.b16 %v503
    %v542 = vpack.c.b16 %v527, %v526
    %v543 = vpack.c.b16 %v529, %v528
    %v544 = vpack.c.b16 %v531, %v530
    %v545 = vpack.c.b16 %v533, %v532
    %v546 = vpack.c.b16 %v535, %v534
    %v547 = vpack.c.b16 %v537, %v536
    %v548 = vpack.c.b16 %v539, %v538
    %v549 = vpack.c.b16 %v541, %v540
    %558 = vmatprep.subr.bf16.mxu0 0
    %559 = vmatpush1.bf16.msra.mxu0 %v549
    %560 = vmatprep.subr.bf16.mxu0 0
    %561 = vmatpush1.bf16.msra.mxu0 %v548
    %562 = vmatprep.subr.bf16.mxu0 0
    %563 = vmatpush1.bf16.msra.mxu0 %v547
    %564 = vmatprep.subr.bf16.mxu0 0
    %565 = vmatpush1.bf16.msra.mxu0 %v546
    %566 = vmatprep.subr.bf16.mxu0 0
    %567 = vmatpush1.bf16.msra.mxu0 %v545
    %568 = vmatprep.subr.bf16.mxu0 0
    %569 = vmatpush1.bf16.msra.mxu0 %v544
    %570 = vmatprep.subr.bf16.mxu0 0
    %571 = vmatpush1.bf16.msra.mxu0 %v543
    %572 = vmatprep.subr.bf16.mxu0 0
    %573 = vmatpush1.bf16.msra.mxu0 %v542
    %574 = vmatprep.subr.bf16.mxu0 0
    %575 = vmatpush2.bf16.msra.mxu0 0
    %576 = vmatprep.subr.bf16.mxu0 0
    %577 = vmatpush2.bf16.msra.mxu0 0
    %578 = vmatprep.subr.bf16.mxu0 0
    %579 = vmatpush2.bf16.msra.mxu0 0
    %580 = vmatprep.subr.bf16.mxu0 0
    %581 = vmatpush2.bf16.msra.mxu0 0
    %582 = vmatprep.subr.bf16.mxu0 0
    %583 = vmatpush2.bf16.msra.mxu0 0
    %584 = vmatprep.subr.bf16.mxu0 0
    %585 = vmatpush2.bf16.msra.mxu0 0
    %586 = vmatprep.subr.bf16.mxu0 0
    %587 = vmatpush2.bf16.msra.mxu0 0
    %588 = vmatprep.subr.bf16.mxu0 0
    %589 = vmatpush2.bf16.msra.mxu0 0
    %590 = vmatprep.mubr.bf16.mxu0 0
    %591 = vmatmul.mubr.bf16.gmra.mxu0 %v487
    %v592 = vpop.f32.mrf.mxu0
    %v593 = vadd.f32 %v508, %v592
    %v594 = vpop.f32.mrf.mxu0
    %v595 = vpop.f32.mrf.mxu0
    %v596 = vadd.f32 %v508, %v595
    %v597 = vpop.f32.mrf.mxu0
    %598 = vdwg.mxu0
    %599 = vst [vmem:[%s5] sm:$0xff] %v593
    %600 = vst [vmem:[%s5 + $0x8] sm:$0xff] %v596
    // Predicated region
    $region30: #{_forward_plain.1} parent=1 // pred_check
      _
    $region31: #{_forward_plain.1} parent=1 // pred_check_branch
      %602 = sbr.rel (0) target = $region33
    $region32: #{_forward_plain.1} parent=1 // pred_region
      _
    $region33: #{_forward_plain.1} parent=1 // pred_fallthru
      _
    // Predicated region
    $region34: #{_forward_plain.1} parent=1 // pred_check
      _
    $region35: #{_forward_plain.1} parent=1 // pred_check_branch
      %604 = sbr.rel (0) target = $region37
    $region36: #{_forward_plain.1} parent=1 // pred_region
      _
    $region37: #{_forward_plain.1} parent=1 // pred_fallthru
      _
    %605 = vsyncpa [#allocation3], 1
    %606 = vsyncpa [#allocation5], 1

</llo_original>
